<compile_context>
chip_gen: v7x
topology: tpu7x:2x2x1
jax: 0.10.0
libtpu: 0.0.40
codegen_flags: <defaults>
</compile_context>

<pallas_src>
import jax
import jax.numpy as jnp
from jax.experimental import pallas as pl
from jax.experimental.pallas import tpu as pltpu

_LANE = 128
_TARGET_TILE_BYTES = 8 * 1024 * 1024    # ~8 MiB tile; ~4x live w/ double-buffered in+out
_VMEM_LIMIT_BYTES = 48 * 1024 * 1024    # safe on v5e/v6e (128 MiB) and v7x (64 MiB)


def _identity_copy_kernel(x_ref, o_ref):
    # Hot path: straight unmasked copy of the current lane-dense VMEM tile.
    o_ref[...] = x_ref[...]


def _choose_tiling(n, itemsize):
    """Pick a lane-dense (rows, cols) flattening and a sublane-aligned row tile.

    cols      : widest multiple of 128 dividing n (lane-dense, unmasked vst path).
    tile_rows : multiple of the dtype's sublane packing (8*4/itemsize), capped by
                the VMEM tile budget, and chosen so the grid has >= 2 steps
                whenever the array is splittable.  rows need NOT be divisible by
                tile_rows: Pallas handles the ragged last block.
    """
    cols = _LANE
    for c in (8192, 4096, 2048, 1024, 512, 256):
        if n % c == 0:
            cols = c
            break
    rows = n // cols

    # Sublane packing: 8 rows for 4-byte, 16 for 2-byte, 32 for 1-byte dtypes.
    sub = max(8, (8 * 4) // itemsize)

    if rows <= sub:
        # Tiny array: one block covering the full (rows, cols) extent.
        return rows, cols, rows

    # Cap tile by the VMEM budget, rounded down to a sublane multiple.
    budget_rows = max(sub, (_TARGET_TILE_BYTES // (cols * itemsize)) // sub * sub)
    # Force >= 2 grid steps (pipelining; dual-TC sharding on v7x).
    half_rows = max(sub, ((rows + 1) // 2) // sub * sub)
    tile_rows = min(budget_rows, half_rows)
    return rows, cols, tile_rows


def _identity_pallas(x):
    orig_shape = x.shape
    n = x.size
    itemsize = jnp.dtype(x.dtype).itemsize
    rows, cols, tile_rows = _choose_tiling(n, itemsize)
    grid = (pl.cdiv(rows, tile_rows),)
    block = (tile_rows, cols)

    x2 = x.reshape(rows, cols)
    y2 = pl.pallas_call(
        _identity_copy_kernel,
        out_shape=jax.ShapeDtypeStruct((rows, cols), x.dtype),
        grid=grid,
        in_specs=[pl.BlockSpec(block, lambda i: (i, 0))],
        out_specs=pl.BlockSpec(block, lambda i: (i, 0)),
        input_output_aliases={0: 0},   # write back into the same HBM buffer
        compiler_params=pltpu.CompilerParams(
            dimension_semantics=("parallel",),   # lets v7x shard across 2 TCs
            vmem_limit_bytes=_VMEM_LIMIT_BYTES,
        ),
    )(x2)
    return y2.reshape(orig_shape)


def sample_forward(x, force_kernel=False):
    """Pallas implementation of Sample.forward (identity).

    Default path: return x directly (an identity does zero compute; avoiding
    the pallas_call avoids 2*N bytes of HBM traffic).  Set force_kernel=True to
    route through the Pallas copy kernel (used by the validation below).
    """
    if not force_kernel:
        return x
    if x.size == 0 or x.size % _LANE != 0:
        # Non-lane-divisible total size: a Pallas copy would need masked partial
        # stores / a single VMEM block.  For an identity, cost nothing instead.
        return x
    return _identity_pallas(x)


if __name__ == "__main__":
    key = jax.random.PRNGKey(0)

    # Small shape consistent with a VGG-style feature map: single-block path.
    x = jax.random.normal(key, (2, 4, 16, 16), dtype=jnp.float32)
    expected = jnp.copy(x)
    y = sample_forward(x, force_kernel=True)
    jax.block_until_ready(y)
    assert y.shape == expected.shape and y.dtype == expected.dtype
    assert jnp.array_equal(y, expected), "identity mismatch (single-block path)"

    # Still small, but exercises the multi-step grid (2 blocks of 16 rows x 8192 lanes).
    x2 = jax.random.normal(jax.random.PRNGKey(1), (16, 16, 32, 32), dtype=jnp.float32)
    expected2 = jnp.copy(x2)
    y2 = sample_forward(x2, force_kernel=True)
    jax.block_until_ready(y2)
    assert jnp.array_equal(y2, expected2), "identity mismatch (multi-block path)"

    # Non-lane-divisible total size takes the metadata-only fallback.
    x3 = jax.random.normal(jax.random.PRNGKey(2), (3, 5, 7), dtype=jnp.float32)
    y3 = sample_forward(x3, force_kernel=True)
    jax.block_until_ready(y3)
    assert jnp.array_equal(y3, x3), "identity mismatch (fallback path)"

    print("KERNEL_OK")
</pallas_src>

<mosaic_0001>
module attributes {stable_mosaic.version = 11 : i64} {
  func.func @_identity_copy_kernel(%arg0: i32, %arg1: memref<1x2048xf32, #tpu.memory_space<vmem>>, %arg2: memref<1x2048xf32, #tpu.memory_space<vmem>>) attributes {dimension_semantics = [#tpu.dimension_semantics<parallel>], iteration_bounds = array<i64: 1>, scalar_prefetch = 0 : i64, scratch_operands = 0 : i64, tpu.core_type = #tpu.core_type<tc>, window_params = [{transform_indices = @transform_0, window_bounds = array<i64: 1, 2048>}, {transform_indices = @transform_1, window_bounds = array<i64: 1, 2048>}]} {
    %c0 = arith.constant 0 : index
    %c0_0 = arith.constant 0 : index
    %0 = vector.load %arg1[%c0, %c0_0] : memref<1x2048xf32, #tpu.memory_space<vmem>>, vector<1x2048xf32>
    %c0_1 = arith.constant 0 : index
    %c0_2 = arith.constant 0 : index
    %1 = vector.load %arg2[%c0_1, %c0_2] : memref<1x2048xf32, #tpu.memory_space<vmem>>, vector<1x2048xf32>
    tpu.vector_store %arg2[%c0_1, %c0_2], %0 {strides = array<i32>} : memref<1x2048xf32, #tpu.memory_space<vmem>>, vector<1x2048xf32>,
    return
  }
  func.func @transform_0(%arg0: i32) -> (i32, i32) {
    %c0_i32 = arith.constant 0 : i32
    %c0_i32_0 = arith.constant 0 : i32
    return %arg0, %c0_i32 : i32, i32
  }
  func.func @transform_1(%arg0: i32) -> (i32, i32) {
    %c0_i32 = arith.constant 0 : i32
    %c0_i32_0 = arith.constant 0 : i32
    return %arg0, %c0_i32 : i32, i32
  }
}

</mosaic_0001>

<llo_original>
// kernel: tpu_custom_call.1
$region0: #{tpu_custom_call.1}
  #allocation0 [shape = 'u32[]', space=smem, size = 0x4, offset = 0x4, fixed_abs, tag = 'smem constant byte address 0x4 - core index']
  #allocation1 [shape = 'u32[144,128]{1,0:T(1,128)}', space=vmem, size = 0x12000, scoped, tag = 'internal scratch']
  %s0 = inlined_call_operand.hbm [shape: f32[1,2048], index: 0, kind: input, shape index: {}, may-alias: {0,1}]
  %s1 = inlined_call_operand.hbm [shape: f32[1,2048], index: 1, kind: output, shape index: {}, may-alias: {0,1}]
  %s2 = sld [smem:[#allocation0]]
  $region18: #{tpu_custom_call.1} parent=0
    _
  %s4 = ssub.s32 1, %s2
  %s5 = scalar_select 0, %s4, %s2
  $region1: #{tpu_custom_call.1} parent=0
    #allocation2 [shape = 'u8[8192]{0}', space=vmem, size = 0x2000, scoped, tag = 'input window, operand 0, single buffered']
    #allocation3 [shape = 's32[1]{0}', space=sflag, size = 0x4, scoped, tag = 'scoped memory for tpu_custom_call.1']
    #allocation4 [shape = 's32[1]{0}', space=sflag, size = 0x4, scoped, tag = 'scoped memory for tpu_custom_call.1']
    #allocation5 [shape = 'u8[8192]{0}', space=vmem, size = 0x2000, scoped, tag = 'output window, operand 0, single buffered']
    %6 = vsyncpa [#allocation3], 0
    %7 = vsyncpa [#allocation4], 0
    // Predicated region
    $region2: #{tpu_custom_call.1} parent=1 // pred_check
      _
    $region3: #{tpu_custom_call.1} parent=1 // pred_check_branch
      %9 = sbr.rel (0) target = $region5
    $region4: #{tpu_custom_call.1} parent=1 // pred_region
      %s11 = ssub.s32 256, 256
      %12 = vsyncadd [#allocation3], %s11
      %s14 = sshll.u32 [#allocation2], 4
      %s15 = int_to_ptr.vmem [resolvable:$true] %s14
      %17 = dma.hbm_to_vmem [thread:$0]  %s0, 256, %s15, [#allocation3]
    $region5: #{tpu_custom_call.1} parent=1 // pred_fallthru
      _
    // Predicated region
    $region6: #{tpu_custom_call.1} parent=1 // pred_check
      _
    $region7: #{tpu_custom_call.1} parent=1 // pred_check_branch
      %19 = sbr.rel (0) target = $region9
    $region8: #{tpu_custom_call.1} parent=1 // pred_region
      %20 = dma.done [#allocation3], 256
    $region9: #{tpu_custom_call.1} parent=1 // pred_fallthru
      _
    %v21 = vld [vmem:[#allocation2] sm:$0xff]
    %v22 = vld [vmem:[#allocation2 + $0x8] sm:$0xff]
    %23 = vst [vmem:[#allocation5] sm:$0xff] %v21
    %24 = vst [vmem:[#allocation5 + $0x8] sm:$0xff] %v22
    // Predicated region
    $region10: #{tpu_custom_call.1} parent=1 // pred_check
      _
    $region11: #{tpu_custom_call.1} parent=1 // pred_check_branch
      %26 = sbr.rel (0) target = $region13
    $region12: #{tpu_custom_call.1} parent=1 // pred_region
      %s28 = ssub.s32 256, 256
      %29 = vsyncadd [#allocation4], %s28
      %s31 = sshll.u32 [#allocation5], 4
      %s32 = int_to_ptr.vmem [resolvable:$true] %s31
      %34 = dma.vmem_to_hbm [thread:$0]  %s32, 256, %s1, [#allocation4]
    $region13: #{tpu_custom_call.1} parent=1 // pred_fallthru
      _
    // Predicated region
    $region14: #{tpu_custom_call.1} parent=1 // pred_check
      _
    $region15: #{tpu_custom_call.1} parent=1 // pred_check_branch
      %36 = sbr.rel (0) target = $region17
    $region16: #{tpu_custom_call.1} parent=1 // pred_region
      %37 = dma.done [#allocation4], 256
    $region17: #{tpu_custom_call.1} parent=1 // pred_fallthru
      _
    %38 = vsyncpa [#allocation3], 1
    %39 = vsyncpa [#allocation4], 1

</llo_original>
